<compile_context>
chip_gen: v7x
topology: tpu7x:2x2x1
jax: 0.10.0
libtpu: 0.0.40
codegen_flags: <defaults>
</compile_context>

<pallas_src>
import functools

import jax
import jax.numpy as jnp
from jax.experimental import pallas as pl
from jax.experimental.pallas import tpu as pltpu


# ---------------- generation-aware budgets ----------------
@functools.lru_cache(maxsize=None)
def _budgets():
    """Return (vmem_limit_bytes, max_block_bytes) based on physical VMEM."""
    cap = 64 * 1024 * 1024
    try:
        info = pltpu.get_tpu_info()
        cap = int(getattr(info, "vmem_capacity_bytes", cap) or cap)
    except Exception:
        pass
    if cap >= 128 * 1024 * 1024:                  # v5e / v6e: 128 MiB physical VMEM
        return 96 * 1024 * 1024, 8 * 1024 * 1024
    return 48 * 1024 * 1024, 4 * 1024 * 1024      # v7x: 64 MiB physical VMEM


def _largest_divisor_multiple(total, mult, cap):
    """Largest d <= cap with d % mult == 0 and total % d == 0, or None."""
    best = None
    d = mult
    hi = min(cap, total)
    while d <= hi:
        if total % d == 0:
            best = d
        d += mult
    return best


def _pool_rows(rows, cols, max_block_bytes):
    row_cap = max(8, (max_block_bytes // 4) // max(cols, 1))
    rb = _largest_divisor_multiple(rows, 8, min(rows, row_cap))
    return rb if rb is not None else rows          # full extent is always legal


def _scale_tiles(rows, cols, max_block_bytes):
    # Lane tile: multiple of 128 dividing cols (target 2048); else full extent.
    ts = _largest_divisor_multiple(cols, 128, min(cols, 2048))
    if ts is None:
        ts = cols
    # Row tile: multiple of 8 dividing rows, block capped at max_block_bytes.
    row_cap = max(8, (max_block_bytes // 4) // max(ts, 1))
    tr = _largest_divisor_multiple(rows, 8, min(rows, row_cap))
    if tr is None:
        tr = rows                                  # rows not a multiple of 8: full extent
        while tr * ts * 4 > max_block_bytes and ts % 256 == 0:
            ts //= 2                               # keep the block inside the budget
    # Keep >= 2 steps on a parallel axis when the grid would collapse (v7x: 2 TCs).
    if rows // tr == 1 and cols // ts == 1 and tr % 16 == 0 and tr > 8:
        tr //= 2
    return tr, ts


# ---------------- kernels ----------------
def _pool_kernel(x_ref, o_ref):
    # x_ref: (Rb, H*W) -- Rb (b, c) planes flattened along the lane axis.
    # Exact f32 global mean over the spatial axis (VPU/XLU; no MXU rounding).
    o_ref[...] = jnp.mean(x_ref[...], axis=1, keepdims=True)


def _gate_kernel(p_ref, w1t_ref, w2t_ref, o_ref):
    # p_ref: (B, C); w1t: (C, hidden); w2t: (hidden, C).  Bias-free SE MLP.
    pooled = p_ref[...]
    h = jnp.dot(pooled, w1t_ref[...], preferred_element_type=jnp.float32)
    h = jnp.maximum(h, 0.0)
    z = jnp.dot(h, w2t_ref[...], preferred_element_type=jnp.float32)
    # Sigmoid: exp on the EUP + reciprocal (exact; this MLP is off the hot path).
    o_ref[...] = pl.reciprocal(1.0 + jnp.exp(-z))


def _scale_kernel(x_ref, g_ref, o_ref):
    o_ref[...] = x_ref[...] * g_ref[...]           # (TR, TS) * (TR, 1) channel gate


# ---------------- wrapper ----------------
@jax.jit
def se_layer_forward(x, w1, w2):
    """x: (B, C, H, W) f32 NCHW.  w1: (hidden, C), w2: (C, hidden) (PyTorch layout)."""
    B, C, H, W = x.shape
    hidden = w1.shape[0]
    rows, cols = B * C, H * W
    vmem_limit, max_block = _budgets()

    x2 = x.reshape(rows, cols)                     # contiguous -> free under jit

    # --- Phase 1: global average pool, many channels per grid step (MiB-scale blocks). ---
    rb = _pool_rows(rows, cols, max_block)
    pooled = pl.pallas_call(
        _pool_kernel,
        out_shape=jax.ShapeDtypeStruct((rows, 1), jnp.float32),
        grid=(rows // rb,),
        in_specs=[pl.BlockSpec((rb, cols), lambda r: (r, 0))],
        out_specs=pl.BlockSpec((rb, 1), lambda r: (r, 0)),
        compiler_params=pltpu.CompilerParams(
            dimension_semantics=("parallel",),
            vmem_limit_bytes=vmem_limit),
    )(x2)

    # --- Phase 2: tiny gate MLP (weights pre-transposed once, wrapper side). ---
    gate = pl.pallas_call(
        _gate_kernel,
        out_shape=jax.ShapeDtypeStruct((B, C), jnp.float32),
        grid=(1,),
        in_specs=[pl.BlockSpec((B, C), lambda i: (0, 0)),
                  pl.BlockSpec((C, hidden), lambda i: (0, 0)),
                  pl.BlockSpec((hidden, C), lambda i: (0, 0))],
        out_specs=pl.BlockSpec((B, C), lambda i: (0, 0)),
        compiler_params=pltpu.CompilerParams(
            dimension_semantics=("arbitrary",),
            vmem_limit_bytes=vmem_limit),
    )(pooled.reshape(B, C), jnp.transpose(w1), jnp.transpose(w2))

    # --- Phase 3: hot HBM-bound scale pass -- large lane-dense double-buffered tiles. ---
    tr, ts = _scale_tiles(rows, cols, max_block)
    out2 = pl.pallas_call(
        _scale_kernel,
        out_shape=jax.ShapeDtypeStruct((rows, cols), x.dtype),
        grid=(rows // tr, cols // ts),
        in_specs=[pl.BlockSpec((tr, ts), lambda r, s: (r, s)),
                  pl.BlockSpec((tr, 1), lambda r, s: (r, 0))],   # gate tile resident across s
        out_specs=pl.BlockSpec((tr, ts), lambda r, s: (r, s)),
        compiler_params=pltpu.CompilerParams(
            dimension_semantics=("parallel", "parallel"),
            vmem_limit_bytes=vmem_limit),
    )(x2, gate.reshape(rows, 1))

    return out2.reshape(B, C, H, W)


# ---------------- reference & self-check ----------------
def reference_forward(x, w1, w2):
    """Pure-JAX reference matching SELayer.forward."""
    pooled = x.mean(axis=(2, 3))                                  # (B, C)
    h = jnp.maximum(pooled @ w1.T, 0.0)
    g = jax.nn.sigmoid(h @ w2.T)
    return x * g[:, :, None, None]


if __name__ == "__main__":
    # Residual_SE(layer_num=1): in_channels = 64, SELayer(64, reduction=16) -> hidden = 4.
    B, C, H, W = 2, 64, 16, 16
    reduction = 16
    hidden = C // reduction

    key = jax.random.PRNGKey(0)
    kx, k1, k2 = jax.random.split(key, 3)

    x = jax.random.normal(kx, (B, C, H, W), dtype=jnp.float32)
    lim1 = 1.0 / (C ** 0.5)
    lim2 = 1.0 / (hidden ** 0.5)
    w1 = jax.random.uniform(k1, (hidden, C), jnp.float32, -lim1, lim1)   # Linear(C -> C//r)
    w2 = jax.random.uniform(k2, (C, hidden), jnp.float32, -lim2, lim2)   # Linear(C//r -> C)

    out = se_layer_forward(x, w1, w2)
    out = jax.block_until_ready(out)

    ref = reference_forward(x, w1, w2)
    assert out.shape == (B, C, H, W)
    assert jnp.allclose(out, ref, atol=1e-5, rtol=1e-5), "mismatch vs reference"

    print("KERNEL_OK")
</pallas_src>

<mosaic_0001>
module attributes {stable_mosaic.version = 11 : i64} {
  func.func @_pool_kernel(%arg0: i32, %arg1: memref<128x256xf32, #tpu.memory_space<vmem>>, %arg2: memref<128x1xf32, #tpu.memory_space<vmem>>) attributes {dimension_semantics = [#tpu.dimension_semantics<parallel>], iteration_bounds = array<i64: 1>, scalar_prefetch = 0 : i64, scratch_operands = 0 : i64, tpu.core_type = #tpu.core_type<tc>, window_params = [{transform_indices = @transform_0, window_bounds = array<i64: 128, 256>}, {transform_indices = @transform_1, window_bounds = array<i64: 128, 1>}]} {
    %c0 = arith.constant 0 : index
    %c0_0 = arith.constant 0 : index
    %0 = vector.load %arg1[%c0, %c0_0] : memref<128x256xf32, #tpu.memory_space<vmem>>, vector<128x256xf32>
    %cst = arith.constant dense<0.000000e+00> : vector<128xf32>
    %1 = vector.multi_reduction <add>, %0, %cst [1] : vector<128x256xf32> to vector<128xf32>
    %2 = vector.shape_cast %1 : vector<128xf32> to vector<128x1xf32>
    %cst_1 = arith.constant 2.560000e+02 : f32
    %3 = vector.broadcast %cst_1 : f32 to vector<128x1xf32>
    %4 = arith.divf %2, %3 : vector<128x1xf32>
    %c0_2 = arith.constant 0 : index
    %c0_3 = arith.constant 0 : index
    %5 = vector.load %arg2[%c0_2, %c0_3] : memref<128x1xf32, #tpu.memory_space<vmem>>, vector<128x1xf32>
    tpu.vector_store %arg2[%c0_2, %c0_3], %4 {strides = array<i32>} : memref<128x1xf32, #tpu.memory_space<vmem>>, vector<128x1xf32>,
    return
  }
  func.func @transform_0(%arg0: i32) -> (i32, i32) {
    %c0_i32 = arith.constant 0 : i32
    %c0_i32_0 = arith.constant 0 : i32
    return %arg0, %c0_i32 : i32, i32
  }
  func.func @transform_1(%arg0: i32) -> (i32, i32) {
    %c0_i32 = arith.constant 0 : i32
    %c0_i32_0 = arith.constant 0 : i32
    return %arg0, %c0_i32 : i32, i32
  }
}

module attributes {stable_mosaic.version = 11 : i64} {
  func.func @_gate_kernel(%arg0: i32, %arg1: memref<2x64xf32, #tpu.memory_space<vmem>>, %arg2: memref<64x4xf32, #tpu.memory_space<vmem>>, %arg3: memref<4x64xf32, #tpu.memory_space<vmem>>, %arg4: memref<2x64xf32, #tpu.memory_space<vmem>>) attributes {dimension_semantics = [#tpu.dimension_semantics<arbitrary>], iteration_bounds = array<i64: 1>, scalar_prefetch = 0 : i64, scratch_operands = 0 : i64, tpu.core_type = #tpu.core_type<tc>, window_params = [{pipeline_mode = #tpu.pipeline_mode<synchronous>, transform_indices = @transform_0, window_bounds = array<i64: 2, 64>}, {pipeline_mode = #tpu.pipeline_mode<synchronous>, transform_indices = @transform_1, window_bounds = array<i64: 64, 4>}, {pipeline_mode = #tpu.pipeline_mode<synchronous>, transform_indices = @transform_2, window_bounds = array<i64: 4, 64>}, {pipeline_mode = #tpu.pipeline_mode<synchronous>, transform_indices = @transform_3, window_bounds = array<i64: 2, 64>}]} {
    %c0 = arith.constant 0 : index
    %c0_0 = arith.constant 0 : index
    %0 = vector.load %arg1[%c0, %c0_0] : memref<2x64xf32, #tpu.memory_space<vmem>>, vector<2x64xf32>
    %c0_1 = arith.constant 0 : index
    %c0_2 = arith.constant 0 : index
    %1 = vector.load %arg2[%c0_1, %c0_2] : memref<64x4xf32, #tpu.memory_space<vmem>>, vector<64x4xf32>
    %cst = arith.constant dense<0.000000e+00> : vector<2x4xf32>
    %2 = tpu.matmul %0, %1, %cst {dimension_numbers = #tpu.dot_dimension_numbers<[1], [0], [0], [1], [0, 0, 1, 1], [], []>} : vector<2x64xf32>, vector<64x4xf32>, vector<2x4xf32> -> vector<2x4xf32>
    %cst_3 = arith.constant 0.000000e+00 : f32
    %3 = vector.broadcast %cst_3 : f32 to vector<2x4xf32>
    %4 = arith.maximumf %2, %3 : vector<2x4xf32>
    %c0_4 = arith.constant 0 : index
    %c0_5 = arith.constant 0 : index
    %5 = vector.load %arg3[%c0_4, %c0_5] : memref<4x64xf32, #tpu.memory_space<vmem>>, vector<4x64xf32>
    %cst_6 = arith.constant dense<0.000000e+00> : vector<2x64xf32>
    %6 = tpu.matmul %4, %5, %cst_6 {dimension_numbers = #tpu.dot_dimension_numbers<[1], [0], [0], [1], [0, 0, 1, 1], [], []>} : vector<2x4xf32>, vector<4x64xf32>, vector<2x64xf32> -> vector<2x64xf32>
    %cst_7 = arith.constant 0.000000e+00 : f32
    %7 = vector.broadcast %cst_7 : f32 to vector<2x64xf32>
    %8 = arith.subf %7, %6 : vector<2x64xf32>
    %9 = math.exp %8 : vector<2x64xf32>
    %cst_8 = arith.constant 1.000000e+00 : f32
    %10 = vector.broadcast %cst_8 : f32 to vector<2x64xf32>
    %11 = arith.addf %10, %9 : vector<2x64xf32>
    %12 = tpu.reciprocal %11 : vector<2x64xf32> -> vector<2x64xf32>
    %c0_9 = arith.constant 0 : index
    %c0_10 = arith.constant 0 : index
    %13 = vector.load %arg4[%c0_9, %c0_10] : memref<2x64xf32, #tpu.memory_space<vmem>>, vector<2x64xf32>
    tpu.vector_store %arg4[%c0_9, %c0_10], %12 {strides = array<i32>} : memref<2x64xf32, #tpu.memory_space<vmem>>, vector<2x64xf32>,
    return
  }
  func.func @transform_0(%arg0: i32) -> (i32, i32) {
    %c0_i32 = arith.constant 0 : i32
    %c0_i32_0 = arith.constant 0 : i32
    %c0_i32_1 = arith.constant 0 : i32
    return %c0_i32, %c0_i32_0 : i32, i32
  }
  func.func @transform_1(%arg0: i32) -> (i32, i32) {
    %c0_i32 = arith.constant 0 : i32
    %c0_i32_0 = arith.constant 0 : i32
    %c0_i32_1 = arith.constant 0 : i32
    return %c0_i32, %c0_i32_0 : i32, i32
  }
  func.func @transform_2(%arg0: i32) -> (i32, i32) {
    %c0_i32 = arith.constant 0 : i32
    %c0_i32_0 = arith.constant 0 : i32
    %c0_i32_1 = arith.constant 0 : i32
    return %c0_i32, %c0_i32_0 : i32, i32
  }
  func.func @transform_3(%arg0: i32) -> (i32, i32) {
    %c0_i32 = arith.constant 0 : i32
    %c0_i32_0 = arith.constant 0 : i32
    %c0_i32_1 = arith.constant 0 : i32
    return %c0_i32, %c0_i32_0 : i32, i32
  }
}

module attributes {stable_mosaic.version = 11 : i64} {
  func.func @_scale_kernel(%arg0: i32, %arg1: i32, %arg2: memref<64x256xf32, #tpu.memory_space<vmem>>, %arg3: memref<64x1xf32, #tpu.memory_space<vmem>>, %arg4: memref<64x256xf32, #tpu.memory_space<vmem>>) attributes {dimension_semantics = [#tpu.dimension_semantics<parallel>, #tpu.dimension_semantics<parallel>], iteration_bounds = array<i64: 2, 1>, scalar_prefetch = 0 : i64, scratch_operands = 0 : i64, tpu.core_type = #tpu.core_type<tc>, window_params = [{transform_indices = @transform_0, window_bounds = array<i64: 64, 256>}, {transform_indices = @transform_1, window_bounds = array<i64: 64, 1>}, {transform_indices = @transform_2, window_bounds = array<i64: 64, 256>}]} {
    %c0 = arith.constant 0 : index
    %c0_0 = arith.constant 0 : index
    %0 = vector.load %arg2[%c0, %c0_0] : memref<64x256xf32, #tpu.memory_space<vmem>>, vector<64x256xf32>
    %c0_1 = arith.constant 0 : index
    %c0_2 = arith.constant 0 : index
    %1 = vector.load %arg3[%c0_1, %c0_2] : memref<64x1xf32, #tpu.memory_space<vmem>>, vector<64x1xf32>
    %2 = vector.broadcast %1 : vector<64x1xf32> to vector<64x256xf32>
    %3 = arith.mulf %0, %2 : vector<64x256xf32>
    %c0_3 = arith.constant 0 : index
    %c0_4 = arith.constant 0 : index
    %4 = vector.load %arg4[%c0_3, %c0_4] : memref<64x256xf32, #tpu.memory_space<vmem>>, vector<64x256xf32>
    tpu.vector_store %arg4[%c0_3, %c0_4], %3 {strides = array<i32>} : memref<64x256xf32, #tpu.memory_space<vmem>>, vector<64x256xf32>,
    return
  }
  func.func @transform_0(%arg0: i32, %arg1: i32) -> (i32, i32) {
    %c0_i32 = arith.constant 0 : i32
    return %arg0, %arg1 : i32, i32
  }
  func.func @transform_1(%arg0: i32, %arg1: i32) -> (i32, i32) {
    %c0_i32 = arith.constant 0 : i32
    %c0_i32_0 = arith.constant 0 : i32
    return %arg0, %c0_i32 : i32, i32
  }
  func.func @transform_2(%arg0: i32, %arg1: i32) -> (i32, i32) {
    %c0_i32 = arith.constant 0 : i32
    return %arg0, %arg1 : i32, i32
  }
}

</mosaic_0001>

<llo_original>
// kernel: se_layer_forward.4
$region0: #{se_layer_forward.4}
  #allocation0 [shape = 'u32[]', space=smem, size = 0x4, offset = 0x4, fixed_abs, tag = 'smem constant byte address 0x4 - core index']
  #allocation1 [shape = 'u32[144,128]{1,0:T(1,128)}', space=vmem, size = 0x12000, scoped, tag = 'internal scratch']
  %s0 = inlined_call_operand.vmem [shape: f32[2,64], index: 0, kind: input, shape index: {}]
  %s1 = inlined_call_operand.vmem [shape: f32[64,4], index: 1, kind: input, shape index: {}]
  %s2 = inlined_call_operand.vmem [shape: f32[4,64], index: 2, kind: input, shape index: {}]
  %s3 = inlined_call_operand.vmem [shape: f32[2,64], index: 3, kind: output, shape index: {}]
  %s4 = sld [smem:[#allocation0]]
  $region22: #{se_layer_forward.4} parent=0
    _
  %s6 = ssub.s32 1, %s4
  %s7 = scalar_select 0, %s6, %s4
  // Predicated region
  $region2: #{se_layer_forward.4} parent=0 // pred_check
    _
  $region3: #{se_layer_forward.4} parent=0 // pred_check_branch
    %9 = sbr.rel (0) target = $region5
  $region4: #{se_layer_forward.4} parent=0 // pred_region
    _
  $region5: #{se_layer_forward.4} parent=0 // pred_fallthru
    _
  // Predicated region
  $region6: #{se_layer_forward.4} parent=0 // pred_check
    _
  $region7: #{se_layer_forward.4} parent=0 // pred_check_branch
    %11 = sbr.rel (0) target = $region9
  $region8: #{se_layer_forward.4} parent=0 // pred_region
    _
  $region9: #{se_layer_forward.4} parent=0 // pred_fallthru
    _
  // Predicated region
  $region10: #{se_layer_forward.4} parent=0 // pred_check
    _
  $region11: #{se_layer_forward.4} parent=0 // pred_check_branch
    %13 = sbr.rel (0) target = $region13
  $region12: #{se_layer_forward.4} parent=0 // pred_region
    _
  $region13: #{se_layer_forward.4} parent=0 // pred_fallthru
    _
  %v14 = vld [vmem:[%s0] sm:$0x3]
  %v15 = vld [vmem:[%s1] sm:$0xff]
  %v16 = vld [vmem:[%s1 + $0x8] sm:$0xff]
  %v17 = vld [vmem:[%s1 + $0x10] sm:$0xff]
  %v18 = vld [vmem:[%s1 + $0x18] sm:$0xff]
  %v19 = vld [vmem:[%s1 + $0x20] sm:$0xff]
  %v20 = vld [vmem:[%s1 + $0x28] sm:$0xff]
  %v21 = vld [vmem:[%s1 + $0x30] sm:$0xff]
  %v22 = vld [vmem:[%s1 + $0x38] sm:$0xff]
  %vm23 = vcmask 523264
  %v25 = vsel %vm23, %v14, 0
  %27 = vmatprep.subr.mxu0 0.0
  %28 = vmatpush1.msra.mxu0 %v15
  %29 = vmatprep.subr.mxu0 0.0
  %30 = vmatpush1.msra.mxu0 %v16
  %31 = vmatprep.subr.mxu0 0.0
  %32 = vmatpush1.msra.mxu0 %v17
  %33 = vmatprep.subr.mxu0 0.0
  %34 = vmatpush1.msra.mxu0 %v18
  %35 = vmatprep.subr.mxu0 0.0
  %36 = vmatpush1.msra.mxu0 %v19
  %37 = vmatprep.subr.mxu0 0.0
  %38 = vmatpush1.msra.mxu0 %v20
  %39 = vmatprep.subr.mxu0 0.0
  %40 = vmatpush1.msra.mxu0 %v21
  %41 = vmatprep.subr.mxu0 0.0
  %42 = vmatpush1.msra.mxu0 %v22
  %43 = vmatprep.subr.mxu0 0.0
  %44 = vmatpush1.msra.mxu0 0.0
  %45 = vmatprep.subr.mxu0 0.0
  %46 = vmatpush1.msra.mxu0 0.0
  %47 = vmatprep.subr.mxu0 0.0
  %48 = vmatpush1.msra.mxu0 0.0
  %49 = vmatprep.subr.mxu0 0.0
  %50 = vmatpush1.msra.mxu0 0.0
  %51 = vmatprep.subr.mxu0 0.0
  %52 = vmatpush1.msra.mxu0 0.0
  %53 = vmatprep.subr.mxu0 0.0
  %54 = vmatpush1.msra.mxu0 0.0
  %55 = vmatprep.subr.mxu0 0.0
  %56 = vmatpush1.msra.mxu0 0.0
  %57 = vmatprep.subr.mxu0 0.0
  %58 = vmatpush1.msra.mxu0 0.0
  %59 = vmatprep.subr.mxu0 0.0
  %60 = vmatpush1.msra.mxu0 0.0
  %61 = vmatprep.subr.mxu0 0.0
  %62 = vmatpush1.msra.mxu0 0.0
  %63 = vmatprep.subr.mxu0 0.0
  %64 = vmatpush1.msra.mxu0 0.0
  %65 = vmatprep.subr.mxu0 0.0
  %66 = vmatpush1.msra.mxu0 0.0
  %67 = vmatprep.subr.mxu0 0.0
  %68 = vmatpush1.msra.mxu0 0.0
  %69 = vmatprep.subr.mxu0 0.0
  %70 = vmatpush1.msra.mxu0 0.0
  %71 = vmatprep.subr.mxu0 0.0
  %72 = vmatpush1.msra.mxu0 0.0
  %73 = vmatprep.subr.mxu0 0.0
  %74 = vmatpush1.msra.mxu0 0.0
  %75 = vmatprep.subr.mxu0 0.0
  %76 = vmatpush1.msra.mxu0 0.0
  %77 = vmatprep.subr.mxu0 0.0
  %78 = vmatpush1.msra.mxu0 0.0
  %79 = vmatprep.subr.mxu0 0.0
  %80 = vmatpush1.msra.mxu0 0.0
  %81 = vmatprep.subr.mxu0 0.0
  %82 = vmatpush1.msra.mxu0 0.0
  %83 = vmatprep.subr.mxu0 0.0
  %84 = vmatpush1.msra.mxu0 0.0
  %85 = vmatprep.subr.mxu0 0.0
  %86 = vmatpush1.msra.mxu0 0.0
  %87 = vmatprep.subr.mxu0 0.0
  %88 = vmatpush1.msra.mxu0 0.0
  %89 = vmatprep.subr.mxu0 0.0
  %90 = vmatpush1.msra.mxu0 0.0
  %91 = vmatprep.mubr.f32.mxu0 0.0
  %92 = vmatmul.mubr.f32.gmra.mrb[0].mxu0 %v25
  %v93 = vpop.f32.mrb[0].mxu0
  %v94 = vadd.f32 0.0, %v93
  %v95 = vpop.f32.mrb[0].mxu0
  %96 = vdwg.mxu0
  %v97 = vmax.f32 %v94, 0.0
  %v98 = vld [vmem:[%s2] sm:$0xf]
  %vm99 = vcmask 31744
  %v101 = vsel %vm99, %v97, 0
  %vm103 = vcmask 1043456
  %v105 = vsel %vm103, %v98, 0
  %107 = vmatprep.subr.mxu0 0.0
  %108 = vmatpush1.msra.mxu0 %v105
  %109 = vmatprep.subr.mxu0 0.0
  %110 = vmatpush1.msra.mxu0 0.0
  %111 = vmatprep.subr.mxu0 0.0
  %112 = vmatpush1.msra.mxu0 0.0
  %113 = vmatprep.subr.mxu0 0.0
  %114 = vmatpush1.msra.mxu0 0.0
  %115 = vmatprep.subr.mxu0 0.0
  %116 = vmatpush1.msra.mxu0 0.0
  %117 = vmatprep.subr.mxu0 0.0
  %118 = vmatpush1.msra.mxu0 0.0
  %119 = vmatprep.subr.mxu0 0.0
  %120 = vmatpush1.msra.mxu0 0.0
  %121 = vmatprep.subr.mxu0 0.0
  %122 = vmatpush1.msra.mxu0 0.0
  %123 = vmatprep.subr.mxu0 0.0
  %124 = vmatpush1.msra.mxu0 0.0
  %125 = vmatprep.subr.mxu0 0.0
  %126 = vmatpush1.msra.mxu0 0.0
  %127 = vmatprep.subr.mxu0 0.0
  %128 = vmatpush1.msra.mxu0 0.0
  %129 = vmatprep.subr.mxu0 0.0
  %130 = vmatpush1.msra.mxu0 0.0
  %131 = vmatprep.subr.mxu0 0.0
  %132 = vmatpush1.msra.mxu0 0.0
  %133 = vmatprep.subr.mxu0 0.0
  %134 = vmatpush1.msra.mxu0 0.0
  %135 = vmatprep.subr.mxu0 0.0
  %136 = vmatpush1.msra.mxu0 0.0
  %137 = vmatprep.subr.mxu0 0.0
  %138 = vmatpush1.msra.mxu0 0.0
  %139 = vmatprep.subr.mxu0 0.0
  %140 = vmatpush1.msra.mxu0 0.0
  %141 = vmatprep.subr.mxu0 0.0
  %142 = vmatpush1.msra.mxu0 0.0
  %143 = vmatprep.subr.mxu0 0.0
  %144 = vmatpush1.msra.mxu0 0.0
  %145 = vmatprep.subr.mxu0 0.0
  %146 = vmatpush1.msra.mxu0 0.0
  %147 = vmatprep.subr.mxu0 0.0
  %148 = vmatpush1.msra.mxu0 0.0
  %149 = vmatprep.subr.mxu0 0.0
  %150 = vmatpush1.msra.mxu0 0.0
  %151 = vmatprep.subr.mxu0 0.0
  %152 = vmatpush1.msra.mxu0 0.0
  %153 = vmatprep.subr.mxu0 0.0
  %154 = vmatpush1.msra.mxu0 0.0
  %155 = vmatprep.subr.mxu0 0.0
  %156 = vmatpush1.msra.mxu0 0.0
  %157 = vmatprep.subr.mxu0 0.0
  %158 = vmatpush1.msra.mxu0 0.0
  %159 = vmatprep.subr.mxu0 0.0
  %160 = vmatpush1.msra.mxu0 0.0
  %161 = vmatprep.subr.mxu0 0.0
  %162 = vmatpush1.msra.mxu0 0.0
  %163 = vmatprep.subr.mxu0 0.0
  %164 = vmatpush1.msra.mxu0 0.0
  %165 = vmatprep.subr.mxu0 0.0
  %166 = vmatpush1.msra.mxu0 0.0
  %167 = vmatprep.subr.mxu0 0.0
  %168 = vmatpush1.msra.mxu0 0.0
  %169 = vmatprep.subr.mxu0 0.0
  %170 = vmatpush1.msra.mxu0 0.0
  %171 = vmatprep.mubr.f32.mxu0 0.0
  %172 = vmatmul.mubr.f32.gmra.mrb[0].mxu0 %v101
  %v173 = vpop.f32.mrb[0].mxu0
  %v174 = vadd.f32 0.0, %v173
  %v175 = vpop.f32.mrb[0].mxu0
  %176 = vdwg.mxu0
  %v177 = vsub.f32 0.0, %v174
  %v178 = vmul.f32 %v177, 1.442695
  %v179 = vpow.pop %v178
  %v180 = vadd.f32 %v179, 1.0
  %v181 = vrcp.pop %v180
  %vm182 = vcmask 517120
  %183 = vst.msk [vmem:[%s3] sm:$0x3] %vm182, %v181
  // Predicated region
  $region14: #{se_layer_forward.4} parent=0 // pred_check
    _
  $region15: #{se_layer_forward.4} parent=0 // pred_check_branch
    %185 = sbr.rel (0) target = $region17
  $region16: #{se_layer_forward.4} parent=0 // pred_region
    _
  $region17: #{se_layer_forward.4} parent=0 // pred_fallthru
    _
  // Predicated region
  $region18: #{se_layer_forward.4} parent=0 // pred_check
    _
  $region19: #{se_layer_forward.4} parent=0 // pred_check_branch
    %187 = sbr.rel (0) target = $region21
  $region20: #{se_layer_forward.4} parent=0 // pred_region
    _
  $region21: #{se_layer_forward.4} parent=0 // pred_fallthru
    _

// kernel: se_layer_forward.3
$region0: #{se_layer_forward.3}
  #allocation0 [shape = 'u32[]', space=smem, size = 0x4, offset = 0x4, fixed_abs, tag = 'smem constant byte address 0x4 - core index']
  #allocation1 [shape = 'u32[144,128]{1,0:T(1,128)}', space=vmem, size = 0x12000, scoped, tag = 'internal scratch']
  %s0 = inlined_call_operand.vmem [shape: f32[128,256], index: 0, kind: input, shape index: {}]
  %s1 = inlined_call_operand.vmem [shape: f32[128,1], index: 1, kind: output, shape index: {}]
  %s2 = sld [smem:[#allocation0]]
  $region14: #{se_layer_forward.3} parent=0
    _
  %s4 = ssub.s32 1, %s2
  %s5 = scalar_select 0, %s4, %s2
  // Predicated region
  $region2: #{se_layer_forward.3} parent=0 // pred_check
    _
  $region3: #{se_layer_forward.3} parent=0 // pred_check_branch
    %7 = sbr.rel (0) target = $region5
  $region4: #{se_layer_forward.3} parent=0 // pred_region
    _
  $region5: #{se_layer_forward.3} parent=0 // pred_fallthru
    _
  %v8 = vld [vmem:[%s0] sm:$0xff]
  %v9 = vld [vmem:[%s0 + $0x8] sm:$0xff]
  %v10 = vld [vmem:[%s0 + $0x10] sm:$0xff]
  %v11 = vld [vmem:[%s0 + $0x18] sm:$0xff]
  %v12 = vld [vmem:[%s0 + $0x20] sm:$0xff]
  %v13 = vld [vmem:[%s0 + $0x28] sm:$0xff]
  %v14 = vld [vmem:[%s0 + $0x30] sm:$0xff]
  %v15 = vld [vmem:[%s0 + $0x38] sm:$0xff]
  %v16 = vld [vmem:[%s0 + $0x40] sm:$0xff]
  %v17 = vld [vmem:[%s0 + $0x48] sm:$0xff]
  %v18 = vld [vmem:[%s0 + $0x50] sm:$0xff]
  %v19 = vld [vmem:[%s0 + $0x58] sm:$0xff]
  %v20 = vld [vmem:[%s0 + $0x60] sm:$0xff]
  %v21 = vld [vmem:[%s0 + $0x68] sm:$0xff]
  %v22 = vld [vmem:[%s0 + $0x70] sm:$0xff]
  %v23 = vld [vmem:[%s0 + $0x78] sm:$0xff]
  %v24 = vld [vmem:[%s0 + $0x80] sm:$0xff]
  %v25 = vld [vmem:[%s0 + $0x88] sm:$0xff]
  %v26 = vld [vmem:[%s0 + $0x90] sm:$0xff]
  %v27 = vld [vmem:[%s0 + $0x98] sm:$0xff]
  %v28 = vld [vmem:[%s0 + $0xa0] sm:$0xff]
  %v29 = vld [vmem:[%s0 + $0xa8] sm:$0xff]
  %v30 = vld [vmem:[%s0 + $0xb0] sm:$0xff]
  %v31 = vld [vmem:[%s0 + $0xb8] sm:$0xff]
  %v32 = vld [vmem:[%s0 + $0xc0] sm:$0xff]
  %v33 = vld [vmem:[%s0 + $0xc8] sm:$0xff]
  %v34 = vld [vmem:[%s0 + $0xd0] sm:$0xff]
  %v35 = vld [vmem:[%s0 + $0xd8] sm:$0xff]
  %v36 = vld [vmem:[%s0 + $0xe0] sm:$0xff]
  %v37 = vld [vmem:[%s0 + $0xe8] sm:$0xff]
  %v38 = vld [vmem:[%s0 + $0xf0] sm:$0xff]
  %v39 = vld [vmem:[%s0 + $0xf8] sm:$0xff]
  %v40 = vadd.f32 %v8, %v9
  %41 = vadd.xlane.f32.xlu0 %v40
  %v42 = vpop.xlane.xlu0 %41
  %v43 = vadd.f32 %v10, %v11
  %44 = vadd.xlane.f32.xlu0 %v43
  %v45 = vpop.xlane.xlu0 %44
  %v46 = vadd.f32 %v12, %v13
  %47 = vadd.xlane.f32.xlu0 %v46
  %v48 = vpop.xlane.xlu0 %47
  %v49 = vadd.f32 %v14, %v15
  %50 = vadd.xlane.f32.xlu0 %v49
  %v51 = vpop.xlane.xlu0 %50
  %v52 = vadd.f32 %v16, %v17
  %53 = vadd.xlane.f32.xlu0 %v52
  %v54 = vpop.xlane.xlu0 %53
  %v55 = vadd.f32 %v18, %v19
  %56 = vadd.xlane.f32.xlu0 %v55
  %v57 = vpop.xlane.xlu0 %56
  %v58 = vadd.f32 %v20, %v21
  %59 = vadd.xlane.f32.xlu0 %v58
  %v60 = vpop.xlane.xlu0 %59
  %v61 = vadd.f32 %v22, %v23
  %62 = vadd.xlane.f32.xlu0 %v61
  %v63 = vpop.xlane.xlu0 %62
  %v64 = vadd.f32 %v24, %v25
  %65 = vadd.xlane.f32.xlu0 %v64
  %v66 = vpop.xlane.xlu0 %65
  %v67 = vadd.f32 %v26, %v27
  %68 = vadd.xlane.f32.xlu0 %v67
  %v69 = vpop.xlane.xlu0 %68
  %v70 = vadd.f32 %v28, %v29
  %71 = vadd.xlane.f32.xlu0 %v70
  %v72 = vpop.xlane.xlu0 %71
  %v73 = vadd.f32 %v30, %v31
  %74 = vadd.xlane.f32.xlu0 %v73
  %v75 = vpop.xlane.xlu0 %74
  %v76 = vadd.f32 %v32, %v33
  %77 = vadd.xlane.f32.xlu0 %v76
  %v78 = vpop.xlane.xlu0 %77
  %v79 = vadd.f32 %v34, %v35
  %80 = vadd.xlane.f32.xlu0 %v79
  %v81 = vpop.xlane.xlu0 %80
  %v82 = vadd.f32 %v36, %v37
  %83 = vadd.xlane.f32.xlu0 %v82
  %v84 = vpop.xlane.xlu0 %83
  %v85 = vadd.f32 %v38, %v39
  %86 = vadd.xlane.f32.xlu0 %v85
  %v87 = vpop.xlane.xlu0 %86
  %v88 = vrcp.pop 256.0
  %v89 = vmul.f32 %v42, %v88
  %v90 = vmul.f32 %v45, %v88
  %v91 = vmul.f32 %v48, %v88
  %v92 = vmul.f32 %v51, %v88
  %v93 = vmul.f32 %v54, %v88
  %v94 = vmul.f32 %v57, %v88
  %v95 = vmul.f32 %v60, %v88
  %v96 = vmul.f32 %v63, %v88
  %v97 = vmul.f32 %v66, %v88
  %v98 = vmul.f32 %v69, %v88
  %v99 = vmul.f32 %v72, %v88
  %v100 = vmul.f32 %v75, %v88
  %v101 = vmul.f32 %v78, %v88
  %v102 = vmul.f32 %v81, %v88
  %v103 = vmul.f32 %v84, %v88
  %v104 = vmul.f32 %v87, %v88
  %vm105 = vcmask 7168
  %106 = vst.msk [vmem:[%s1] sm:$0xff] %vm105, %v89
  %107 = vst.msk [vmem:[%s1 + $0x8] sm:$0xff] %vm105, %v90
  %108 = vst.msk [vmem:[%s1 + $0x10] sm:$0xff] %vm105, %v91
  %109 = vst.msk [vmem:[%s1 + $0x18] sm:$0xff] %vm105, %v92
  %110 = vst.msk [vmem:[%s1 + $0x20] sm:$0xff] %vm105, %v93
  %111 = vst.msk [vmem:[%s1 + $0x28] sm:$0xff] %vm105, %v94
  %112 = vst.msk [vmem:[%s1 + $0x30] sm:$0xff] %vm105, %v95
  %113 = vst.msk [vmem:[%s1 + $0x38] sm:$0xff] %vm105, %v96
  %114 = vst.msk [vmem:[%s1 + $0x40] sm:$0xff] %vm105, %v97
  %115 = vst.msk [vmem:[%s1 + $0x48] sm:$0xff] %vm105, %v98
  %116 = vst.msk [vmem:[%s1 + $0x50] sm:$0xff] %vm105, %v99
  %117 = vst.msk [vmem:[%s1 + $0x58] sm:$0xff] %vm105, %v100
  %118 = vst.msk [vmem:[%s1 + $0x60] sm:$0xff] %vm105, %v101
  %119 = vst.msk [vmem:[%s1 + $0x68] sm:$0xff] %vm105, %v102
  %120 = vst.msk [vmem:[%s1 + $0x70] sm:$0xff] %vm105, %v103
  %121 = vst.msk [vmem:[%s1 + $0x78] sm:$0xff] %vm105, %v104
  // Predicated region
  $region6: #{se_layer_forward.3} parent=0 // pred_check
    _
  $region7: #{se_layer_forward.3} parent=0 // pred_check_branch
    %123 = sbr.rel (0) target = $region9
  $region8: #{se_layer_forward.3} parent=0 // pred_region
    _
  $region9: #{se_layer_forward.3} parent=0 // pred_fallthru
    _
  // Predicated region
  $region10: #{se_layer_forward.3} parent=0 // pred_check
    _
  $region11: #{se_layer_forward.3} parent=0 // pred_check_branch
    %125 = sbr.rel (0) target = $region13
  $region12: #{se_layer_forward.3} parent=0 // pred_region
    _
  $region13: #{se_layer_forward.3} parent=0 // pred_fallthru
    _

// kernel: se_layer_forward.5
$region0: #{se_layer_forward.5}
  #allocation0 [shape = 'u32[]', space=smem, size = 0x4, offset = 0x4, fixed_abs, tag = 'smem constant byte address 0x4 - core index']
  #allocation1 [shape = 'u32[144,128]{1,0:T(1,128)}', space=vmem, size = 0x12000, scoped, tag = 'internal scratch']
  %s0 = inlined_call_operand.vmem [shape: f32[128,256], index: 0, kind: input, shape index: {}]
  %s1 = inlined_call_operand.vmem [shape: f32[128,1], index: 1, kind: input, shape index: {}]
  %s2 = inlined_call_operand.vmem [shape: f32[128,256], index: 2, kind: output, shape index: {}]
  %s3 = sld [smem:[#allocation0]]
  $region41: #{se_layer_forward.5} parent=0
    _
  %s5 = ssub.s32 1, %s3
  %s6 = scalar_select 0, %s5, %s3
  loop: start=0, step=1, limit=4
  $region2: #{se_layer_forward.5} parent=0 // loop_pre_header
    _
  $region3: #{se_layer_forward.5} parent=0 // loop_header
    %s8 = sphi 0, %s12
    %p9 = scmp.ge.s32.totalorder %s8, 4
    %s15 = sphi 0, %s27
    %s16 = sphi 0, %s23
    %s17 = sphi 0, %s15
    %s18 = sphi 0, %s16
    %s19 = sphi 0, %s17
    %s20 = sphi 0, %s18
    %s32 = sphi 0, %s34
    %s35 = sphi 0, %s32
    %s36 = sphi 0, %s35
    %s52 = sphi 0, %s36
    %s58 = sphi 0, %s60
    %s61 = sphi 0, %s58
    %s62 = sphi 0, %s61
    %s78 = sphi 0, %s62
    %s86 = sphi 0, %s88
    %s89 = sphi 0, %s86
    %s90 = sphi 0, %s89
    %s106 = sphi 0, %s90
  $region4: #{se_layer_forward.5} parent=0 // loop_header_branch
    %11 = sbr.rel (%p9) target = $region8
  $region5: #{se_layer_forward.5} parent=0 // loop_body
    %s13 = ssub.s32 %s8, 1
    %s14 = ssub.s32 %s8, 2
    %s21 = sadd.s32 1, %s16
    %p22 = scmp.ge.s32.totalorder %s21, 1
    %s23 = scalar_select %p22, 0, %s21
    %s24 = sadd.s32 1, %s15
    %s25 = scalar_select %p22, %s24, %s15
    %p26 = scmp.ge.s32.totalorder %s25, 2
    %s27 = scalar_select %p26, 0, %s25
    %s28 = ssub.s32 %s15, %s27
    %s29 = ssub.s32 %s16, %s23
    %s30 = sor.u32 %s28, %s29
    %p31 = scmp.eq.s32.totalorder %s30, 0
    %s33 = sadd.s32 %s32, 1
    %s34 = scalar_select %p31, %s32, %s33
    %p37 = pneg %p31
    %p38 = scmp.eq.s32.totalorder %s8, 1
    %p39 = por %p37, %p38
    %p40 = scmp.ne.s32.totalorder %s32, %s35
    %p41 = scmp.eq.s32.totalorder %s8, 0
    %p42 = por %p40, %p41
    %p43 = scmp.ne.s32.totalorder %s32, %s35
    %p44 = scmp.eq.s32.totalorder %s13, 1
    %p45 = por %p43, %p44
    %p46 = scmp.ne.s32.totalorder %s35, %s36
    %p47 = scmp.eq.s32.totalorder %s13, 0
    %p48 = por %p46, %p47
    %p49 = scmp.ne.s32.totalorder %s35, %s36
    %p50 = scmp.eq.s32.totalorder %s14, 1
    %p51 = por %p49, %p50
    %p53 = scmp.ne.s32.totalorder %s36, %s52
    %p54 = scmp.eq.s32.totalorder %s14, 0
    %p55 = por %p53, %p54
    %s56 = ssub.s32 %s15, %s27
    %p57 = scmp.eq.s32.totalorder %s56, 0
    %s59 = sadd.s32 %s58, 1
    %s60 = scalar_select %p57, %s58, %s59
    %p63 = pneg %p57
    %p64 = scmp.eq.s32.totalorder %s8, 1
    %p65 = por %p63, %p64
    %p66 = scmp.ne.s32.totalorder %s58, %s61
    %p67 = scmp.eq.s32.totalorder %s8, 0
    %p68 = por %p66, %p67
    %p69 = scmp.ne.s32.totalorder %s58, %s61
    %p70 = scmp.eq.s32.totalorder %s13, 1
    %p71 = por %p69, %p70
    %p72 = scmp.ne.s32.totalorder %s61, %s62
    %p73 = scmp.eq.s32.totalorder %s13, 0
    %p74 = por %p72, %p73
    %p75 = scmp.ne.s32.totalorder %s61, %s62
    %p76 = scmp.eq.s32.totalorder %s14, 1
    %p77 = por %p75, %p76
    %p79 = scmp.ne.s32.totalorder %s62, %s78
    %p80 = scmp.eq.s32.totalorder %s14, 0
    %p81 = por %p79, %p80
    %s82 = ssub.s32 %s15, %s27
    %s83 = ssub.s32 %s16, %s23
    %s84 = sor.u32 %s82, %s83
    %p85 = scmp.eq.s32.totalorder %s84, 0
    %s87 = sadd.s32 %s86, 1
    %s88 = scalar_select %p85, %s86, %s87
    %p91 = pneg %p85
    %p92 = scmp.eq.s32.totalorder %s8, 1
    %p93 = por %p91, %p92
    %p94 = scmp.ne.s32.totalorder %s86, %s89
    %p95 = scmp.eq.s32.totalorder %s8, 0
    %p96 = por %p94, %p95
    %p97 = scmp.ne.s32.totalorder %s86, %s89
    %p98 = scmp.eq.s32.totalorder %s13, 1
    %p99 = por %p97, %p98
    %p100 = scmp.ne.s32.totalorder %s89, %s90
    %p101 = scmp.eq.s32.totalorder %s13, 0
    %p102 = por %p100, %p101
    %p103 = scmp.ne.s32.totalorder %s89, %s90
    %p104 = scmp.eq.s32.totalorder %s14, 1
    %p105 = por %p103, %p104
    %p107 = scmp.ne.s32.totalorder %s90, %s106
    %p108 = scmp.eq.s32.totalorder %s14, 0
    %p109 = por %p107, %p108
    %p110 = scmp.le.s32.totalorder 1, %s8
    %p111 = scmp.lt.s32.totalorder %s8, 3
    %p112 = pnand %p110, %p111
    %p113 = pneg %p112
    // Predicated region
    $region9: #{se_layer_forward.5} parent=5 // pred_check
      _
    $region10: #{se_layer_forward.5} parent=5 // pred_check_branch
      %115 = sbr.rel (%p112) target = $region12
    $region11: #{se_layer_forward.5} parent=5 // pred_region
      %s116 = ssub.s32 %s8, 1
    $region12: #{se_layer_forward.5} parent=5 // pred_fallthru
      _
    %p117 = scmp.lt.s32.totalorder %s8, 2
    // Predicated region
    $region13: #{se_layer_forward.5} parent=5 // pred_check
      %p118 = pneg %p117
    $region14: #{se_layer_forward.5} parent=5 // pred_check_branch
      %120 = sbr.rel (%p118) target = $region16
    $region15: #{se_layer_forward.5} parent=5 // pred_region
      // Predicated region
      $region17: #{se_layer_forward.5} parent=15 // pred_check
        %p121 = pneg %p42
      $region18: #{se_layer_forward.5} parent=15 // pred_check_branch
        %123 = sbr.rel (%p121) target = $region20
      $region19: #{se_layer_forward.5} parent=15 // pred_region
        %s124 = smul.u32 8, %s15
        %s125 = smul.u32 2, %s16
        %p126 = scmp.lt.s32.totalorder %s124, 15
        %s127 = scalar_select %p126, %s124, 15
        %p128 = scmp.lt.s32.totalorder %s125, 1
        %s129 = scalar_select %p128, %s125, 1
        %s130 = smul.addr %s127, 2
        %s131 = sadd.s32 %s129, %s130
        %s132 = smul.addr %s131, 8
        %s133 = scalar_lea.vmem %s0, %s132
        %s134 = smul.u32 8, %s15
        %s135 = smul.u32 2, %s16
      $region20: #{se_layer_forward.5} parent=15 // pred_fallthru
        _
      // Predicated region
      $region21: #{se_layer_forward.5} parent=15 // pred_check
        %p136 = pneg %p68
      $region22: #{se_layer_forward.5} parent=15 // pred_check_branch
        %138 = sbr.rel (%p136) target = $region24
      $region23: #{se_layer_forward.5} parent=15 // pred_region
        %s139 = smul.u32 8, %s15
        %p140 = scmp.lt.s32.totalorder %s139, 15
        %s141 = scalar_select %p140, %s139, 15
        %s142 = smul.addr %s141, 8
        %s143 = scalar_lea.vmem %s1, %s142
        %s144 = smul.u32 8, %s15
      $region24: #{se_layer_forward.5} parent=15 // pred_fallthru
        _
    $region16: #{se_layer_forward.5} parent=5 // pred_fallthru
      _
    %p145 = scmp.le.s32.totalorder 1, %s8
    %p146 = scmp.lt.s32.totalorder %s8, 3
    %p147 = pnand %p145, %p146
    %p148 = pneg %p147
    // Predicated region
    $region25: #{se_layer_forward.5} parent=5 // pred_check
      _
    $region26: #{se_layer_forward.5} parent=5 // pred_check_branch
      %150 = sbr.rel (%p147) target = $region28
    $region27: #{se_layer_forward.5} parent=5 // pred_region
      %s151 = ssub.s32 %s8, 1
      %s152 = smul.u32 8, %s17
      %s153 = smul.u32 2, %s18
      %p154 = scmp.lt.s32.totalorder %s152, 15
      %s155 = scalar_select %p154, %s152, 15
      %p156 = scmp.lt.s32.totalorder %s153, 1
      %s157 = scalar_select %p156, %s153, 1
      %s158 = smul.addr %s155, 2
      %s159 = sadd.s32 %s157, %s158
      %s160 = smul.addr %s159, 8
      %s161 = scalar_lea.vmem %s0, %s160
      %p162 = pneg %p48
      %p163 = pneg %p45
      %s164 = smul.u32 8, %s17
      %p165 = scmp.lt.s32.totalorder %s164, 15
      %s166 = scalar_select %p165, %s164, 15
      %s167 = smul.addr %s166, 8
      %s168 = scalar_lea.vmem %s1, %s167
      %p169 = pneg %p74
      %p170 = pneg %p71
      %p171 = pneg %p102
      %p172 = pneg %p99
      %s173 = smul.u32 8, %s17
      %s174 = smul.u32 2, %s18
      %p175 = scmp.lt.s32.totalorder %s173, 15
      %s176 = scalar_select %p175, %s173, 15
      %p177 = scmp.lt.s32.totalorder %s174, 1
      %s178 = scalar_select %p177, %s174, 1
      %s179 = smul.addr %s176, 2
      %s180 = sadd.s32 %s178, %s179
      %s181 = smul.addr %s180, 8
      %s182 = scalar_lea.vmem %s2, %s181
      %s183 = smul.u32 8, %s17
      %s184 = smul.u32 2, %s18
      %p185 = scmp.lt.s32.totalorder %s183, 15
      %s186 = scalar_select %p185, %s183, 15
      %p187 = scmp.lt.s32.totalorder %s184, 1
      %s188 = scalar_select %p187, %s184, 1
      %s189 = smul.addr %s186, 2
      %s190 = sadd.s32 %s188, %s189
      %s191 = smul.addr %s190, 8
      %s192 = scalar_lea.vmem %s0, %s191
      %s193 = smul.u32 8, %s17
      %s194 = smul.u32 2, %s18
      %s195 = smul.u32 8, %s17
      %p196 = scmp.lt.s32.totalorder %s195, 15
      %s197 = scalar_select %p196, %s195, 15
      %s198 = smul.addr %s197, 8
      %s199 = scalar_lea.vmem %s1, %s198
      %s200 = smul.u32 8, %s17
      %s201 = smul.u32 8, %s17
      %s202 = smul.u32 2, %s18
      %p203 = scmp.lt.s32.totalorder %s201, 15
      %s204 = scalar_select %p203, %s201, 15
      %p205 = scmp.lt.s32.totalorder %s202, 1
      %s206 = scalar_select %p205, %s202, 1
      %s207 = smul.addr %s204, 2
      %s208 = sadd.s32 %s206, %s207
      %s209 = smul.addr %s208, 8
      %s210 = scalar_lea.vmem %s2, %s209
      %s211 = smul.u32 8, %s17
      %s212 = smul.u32 2, %s18
      %v213 = vld [vmem:[%s192] sm:$0xff]
      %v214 = vld [vmem:[%s192 + $0x8] sm:$0xff]
      %v215 = vld [vmem:[%s192 + $0x10] sm:$0xff]
      %v216 = vld [vmem:[%s192 + $0x18] sm:$0xff]
      %v217 = vld [vmem:[%s192 + $0x20] sm:$0xff]
      %v218 = vld [vmem:[%s192 + $0x28] sm:$0xff]
      %v219 = vld [vmem:[%s192 + $0x30] sm:$0xff]
      %v220 = vld [vmem:[%s192 + $0x38] sm:$0xff]
      %v221 = vld [vmem:[%s192 + $0x40] sm:$0xff]
      %v222 = vld [vmem:[%s192 + $0x48] sm:$0xff]
      %v223 = vld [vmem:[%s192 + $0x50] sm:$0xff]
      %v224 = vld [vmem:[%s192 + $0x58] sm:$0xff]
      %v225 = vld [vmem:[%s192 + $0x60] sm:$0xff]
      %v226 = vld [vmem:[%s192 + $0x68] sm:$0xff]
      %v227 = vld [vmem:[%s192 + $0x70] sm:$0xff]
      %v228 = vld [vmem:[%s192 + $0x78] sm:$0xff]
      %v229 = vld [vmem:[%s199] sm:$0xff]
      %v230 = vld [vmem:[%s199 + $0x8] sm:$0xff]
      %v231 = vld [vmem:[%s199 + $0x10] sm:$0xff]
      %v232 = vld [vmem:[%s199 + $0x18] sm:$0xff]
      %v233 = vld [vmem:[%s199 + $0x20] sm:$0xff]
      %v234 = vld [vmem:[%s199 + $0x28] sm:$0xff]
      %v235 = vld [vmem:[%s199 + $0x30] sm:$0xff]
      %v236 = vld [vmem:[%s199 + $0x38] sm:$0xff]
      %238 = vset.pattern.permute.xlu0 0
      %239 = vperm.xlu0 %238, %v229
      %v240 = vpop.permute.xlu0 %239
      %243 = vset.pattern.permute.xlu0 0
      %244 = vperm.xlu0 %243, %v230
      %v245 = vpop.permute.xlu0 %244
      %248 = vset.pattern.permute.xlu0 0
      %249 = vperm.xlu0 %248, %v231
      %v250 = vpop.permute.xlu0 %249
      %253 = vset.pattern.permute.xlu0 0
      %254 = vperm.xlu0 %253, %v232
      %v255 = vpop.permute.xlu0 %254
      %258 = vset.pattern.permute.xlu0 0
      %259 = vperm.xlu0 %258, %v233
      %v260 = vpop.permute.xlu0 %259
      %263 = vset.pattern.permute.xlu0 0
      %264 = vperm.xlu0 %263, %v234
      %v265 = vpop.permute.xlu0 %264
      %268 = vset.pattern.permute.xlu0 0
      %269 = vperm.xlu0 %268, %v235
      %v270 = vpop.permute.xlu0 %269
      %273 = vset.pattern.permute.xlu0 0
      %274 = vperm.xlu0 %273, %v236
      %v275 = vpop.permute.xlu0 %274
      %v277 = vmul.f32 %v213, %v240
      %v278 = vmul.f32 %v214, %v240
      %v279 = vmul.f32 %v215, %v245
      %v280 = vmul.f32 %v216, %v245
      %v281 = vmul.f32 %v217, %v250
      %v282 = vmul.f32 %v218, %v250
      %v283 = vmul.f32 %v219, %v255
      %v284 = vmul.f32 %v220, %v255
      %v285 = vmul.f32 %v221, %v260
      %v286 = vmul.f32 %v222, %v260
      %v287 = vmul.f32 %v223, %v265
      %v288 = vmul.f32 %v224, %v265
      %v289 = vmul.f32 %v225, %v270
      %v290 = vmul.f32 %v226, %v270
      %v291 = vmul.f32 %v227, %v275
      %v292 = vmul.f32 %v228, %v275
      %293 = vst [vmem:[%s210] sm:$0xff] %v277
      %294 = vst [vmem:[%s210 + $0x8] sm:$0xff] %v278
      %295 = vst [vmem:[%s210 + $0x10] sm:$0xff] %v279
      %296 = vst [vmem:[%s210 + $0x18] sm:$0xff] %v280
      %297 = vst [vmem:[%s210 + $0x20] sm:$0xff] %v281
      %298 = vst [vmem:[%s210 + $0x28] sm:$0xff] %v282
      %299 = vst [vmem:[%s210 + $0x30] sm:$0xff] %v283
      %300 = vst [vmem:[%s210 + $0x38] sm:$0xff] %v284
      %301 = vst [vmem:[%s210 + $0x40] sm:$0xff] %v285
      %302 = vst [vmem:[%s210 + $0x48] sm:$0xff] %v286
      %303 = vst [vmem:[%s210 + $0x50] sm:$0xff] %v287
      %304 = vst [vmem:[%s210 + $0x58] sm:$0xff] %v288
      %305 = vst [vmem:[%s210 + $0x60] sm:$0xff] %v289
      %306 = vst [vmem:[%s210 + $0x68] sm:$0xff] %v290
      %307 = vst [vmem:[%s210 + $0x70] sm:$0xff] %v291
      %308 = vst [vmem:[%s210 + $0x78] sm:$0xff] %v292
      %s309 = smul.u32 8, %s17
      %s310 = smul.u32 2, %s18
      %p311 = scmp.lt.s32.totalorder %s309, 15
      %s312 = scalar_select %p311, %s309, 15
      %p313 = scmp.lt.s32.totalorder %s310, 1
      %s314 = scalar_select %p313, %s310, 1
      %s315 = smul.addr %s312, 2
      %s316 = sadd.s32 %s314, %s315
      %s317 = smul.addr %s316, 8
      %s318 = scalar_lea.vmem %s2, %s317
      // Predicated region
      $region29: #{se_layer_forward.5} parent=27 // pred_check
        %p319 = pneg %p99
      $region30: #{se_layer_forward.5} parent=27 // pred_check_branch
        %321 = sbr.rel (%p319) target = $region32
      $region31: #{se_layer_forward.5} parent=27 // pred_region
        %s322 = smul.u32 8, %s17
        %s323 = smul.u32 2, %s18
      $region32: #{se_layer_forward.5} parent=27 // pred_fallthru
        _
    $region28: #{se_layer_forward.5} parent=5 // pred_fallthru
      _
    %p324 = scmp.le.s32.totalorder 2, %s8
    // Predicated region
    $region33: #{se_layer_forward.5} parent=5 // pred_check
      %p325 = pneg %p324
    $region34: #{se_layer_forward.5} parent=5 // pred_check_branch
      %327 = sbr.rel (%p325) target = $region36
    $region35: #{se_layer_forward.5} parent=5 // pred_region
      %s328 = ssub.s32 %s8, 2
      // Predicated region
      $region37: #{se_layer_forward.5} parent=35 // pred_check
        %p329 = pneg %p105
      $region38: #{se_layer_forward.5} parent=35 // pred_check_branch
        %331 = sbr.rel (%p329) target = $region40
      $region39: #{se_layer_forward.5} parent=35 // pred_region
        %s332 = smul.u32 8, %s19
        %s333 = smul.u32 2, %s20
        %p334 = scmp.lt.s32.totalorder %s332, 15
        %s335 = scalar_select %p334, %s332, 15
        %p336 = scmp.lt.s32.totalorder %s333, 1
        %s337 = scalar_select %p336, %s333, 1
        %s338 = smul.addr %s335, 2
        %s339 = sadd.s32 %s337, %s338
        %s340 = smul.addr %s339, 8
        %s341 = scalar_lea.vmem %s2, %s340
      $region40: #{se_layer_forward.5} parent=35 // pred_fallthru
        _
    $region36: #{se_layer_forward.5} parent=5 // pred_fallthru
      _
  $region6: #{se_layer_forward.5} parent=0 // loop_footer
    %s12 = sadd.s32 1, %s8
  $region7: #{se_layer_forward.5} parent=0 // loop_footer_branch
    %7 = sbr.rel target = $region3
  $region8: #{se_layer_forward.5} parent=0 // loop_exit
    _

</llo_original>
